<compile_context>
chip_gen: v5e
topology: v5e:2x2
jax: 0.10.0
libtpu: 0.0.40
codegen_flags: <defaults>
</compile_context>

<pallas_src>
import functools

import jax
import jax.numpy as jnp
from jax.experimental import pallas as pl
from jax.experimental.pallas import tpu as pltpu


def _tcn_kernel(xwin_ref, w1_ref, b1_ref, w2_ref, b2_ref, out_ref, *,
                L, pre_len):
    """One batch-block per grid step; everything stays in registers.

    xwin_ref : (Bb, Wn, D)  window of the (2*pad, 2*pad2) zero-padded input
                            covering padded time indices [L-pre_len, L+2*(K-1)),
                            i.e. exactly what the last pre_len outputs depend on.
    w1_ref   : (K, D, F)    conv1 weight, tap-major (torch W1[o,i,k] -> w1[k,i,o])
    b1_ref   : (1, F)
    w2_ref   : (K, F, D)    conv2 weight, tap-major
    b2_ref   : (1, D)
    out_ref  : (Bb, pre_len, D)
    """
    Bb = xwin_ref.shape[0]
    K = w1_ref.shape[0]
    F = w1_ref.shape[2]
    D = w2_ref.shape[2]
    pad = (K - 1) // 2
    P = pre_len
    T0 = L - P                      # first emitted time index
    Hn = P + K - 1                  # hidden rows needed by conv2

    b1 = b1_ref[...]                # (1, F), broadcasts over rows (hoisted)
    b2 = b2_ref[...]                # (1, D)

    # Hidden-row validity: row r of h corresponds to hidden time T0 + r - pad;
    # rows outside [0, L) are conv2's zero 'same'-padding -> force to zero.
    r = jax.lax.broadcasted_iota(jnp.int32, (Hn, 1), 0)
    h_valid = (r >= (pad - T0)) & (r < (P + pad))

    for b in range(Bb):             # small static batch block -> unrolled
        xw = xwin_ref[b]            # (Wn, D)

        # conv1: Conv1d(D -> F, K, padding='same'), only the Hn needed rows.
        h = jnp.zeros((Hn, F), jnp.float32)
        for k in range(K):          # K small & static -> unrolled tap matmuls
            h = h + jnp.dot(xw[k:k + Hn, :], w1_ref[k],
                            preferred_element_type=jnp.float32)
        h = jnp.maximum(h + b1, 0.0)        # bias + ReLU (dropout = identity, eval)
        h = jnp.where(h_valid, h, 0.0)      # zero the virtual-padding rows of h

        # conv2: Conv1d(F -> D, K, padding='same'), only the pre_len output rows.
        y = jnp.zeros((P, D), jnp.float32)
        for k in range(K):
            y = y + jnp.dot(h[k:k + P, :], w2_ref[k],
                            preferred_element_type=jnp.float32)
        y = y + b2

        # Residual add + ReLU. Original x rows T0..L-1 sit at window rows 2*pad+s.
        out_ref[b] = jnp.maximum(xw[2 * pad:2 * pad + P, :] + y, 0.0)


def tcn_forward(x, params, *, pre_len, batch_block=None):
    """x: (B, L, D) float32 -> (B, pre_len, D) float32."""
    w1, b1, w2, b2 = params
    B, L, D = x.shape
    K, _, F = w1.shape
    assert pre_len <= L
    pad = (K - 1) // 2
    pad2 = K - 1 - pad
    P = pre_len
    T0 = L - P
    Wn = P + 2 * (K - 1)            # input rows the emitted outputs depend on
    Hn = P + K - 1

    if batch_block is None:
        # One fat grid step (best on single-TC v5e/v6e).  On v7x pass
        # batch_block = B // 2 so each TensorCore gets one chunk.
        batch_block = B
    assert B % batch_block == 0
    grid = (B // batch_block,)

    # Single activation stream: zero-pad time by (2*pad, 2*pad2) and keep only
    # the trailing window.  XLA fuses pad+slice into one small copy; this is
    # smaller than x itself whenever pre_len < his_len.
    xwin = jnp.pad(x, ((0, 0), (2 * pad, 2 * pad2), (0, 0)))[:, T0:T0 + Wn, :]

    flops = 2 * B * (Hn * K * D * F + P * K * F * D)
    bytes_accessed = 4 * (B * Wn * D + B * P * D + K * D * F + F + K * F * D + D)

    kernel = functools.partial(_tcn_kernel, L=L, pre_len=pre_len)
    return pl.pallas_call(
        kernel,
        out_shape=jax.ShapeDtypeStruct((B, P, D), jnp.float32),
        grid_spec=pltpu.PrefetchScalarGridSpec(
            num_scalar_prefetch=0,
            grid=grid,
            in_specs=[
                pl.BlockSpec((batch_block, Wn, D), lambda g: (g, 0, 0)),
                pl.BlockSpec((K, D, F), lambda g: (0, 0, 0)),
                pl.BlockSpec((1, F), lambda g: (0, 0)),
                pl.BlockSpec((K, F, D), lambda g: (0, 0, 0)),
                pl.BlockSpec((1, D), lambda g: (0, 0)),
            ],
            out_specs=pl.BlockSpec((batch_block, P, D), lambda g: (g, 0, 0)),
        ),
        compiler_params=pltpu.CompilerParams(
            dimension_semantics=("parallel",)),
        cost_estimate=pl.CostEstimate(flops=flops, transcendentals=0,
                                      bytes_accessed=bytes_accessed),
    )(xwin, w1, b1, w2, b2)


def tcn_reference(x, params, pre_len):
    """Pure-JAX reference of the same forward pass (matches torch semantics)."""
    w1, b1, w2, b2 = params
    K = w1.shape[0]
    L = x.shape[1]
    pad_lo = (K - 1) // 2
    pad_hi = K - 1 - pad_lo
    xpad = jnp.pad(x, ((0, 0), (pad_lo, pad_hi), (0, 0)))
    h = sum(jnp.einsum('btd,df->btf', xpad[:, k:k + L, :], w1[k])
            for k in range(K)) + b1
    h = jnp.maximum(h, 0.0)
    hpad = jnp.pad(h, ((0, 0), (pad_lo, pad_hi), (0, 0)))
    y = sum(jnp.einsum('btf,fd->btd', hpad[:, k:k + L, :], w2[k])
            for k in range(K)) + b2
    out = jnp.maximum(x + y, 0.0)
    return out[:, -pre_len:, :]


if __name__ == "__main__":
    # Small shapes consistent with TCN(d_feature=7, his_len=..., pre_len=..., ...)
    B = 2
    d_feature = 7
    his_len = 16
    pre_len = 8
    num_filters = 8
    kernel_size = 3

    key = jax.random.PRNGKey(0)
    k1, k2, k3, k4, k5 = jax.random.split(key, 5)
    # torch Conv1d weight (O, I, K) stored tap-major (K, I, O).
    w1 = 0.1 * jax.random.normal(k1, (kernel_size, d_feature, num_filters), jnp.float32)
    b1 = 0.1 * jax.random.normal(k2, (1, num_filters), jnp.float32)
    w2 = 0.1 * jax.random.normal(k3, (kernel_size, num_filters, d_feature), jnp.float32)
    b2 = 0.1 * jax.random.normal(k4, (1, d_feature), jnp.float32)
    params = (w1, b1, w2, b2)

    x = jax.random.normal(k5, (B, his_len, d_feature), jnp.float32)

    out = tcn_forward(x, params, pre_len=pre_len)
    jax.block_until_ready(out)

    ref = tcn_reference(x, params, pre_len)
    assert out.shape == (B, pre_len, d_feature), out.shape
    assert jnp.allclose(out, ref, atol=1e-5, rtol=1e-5), "mismatch vs reference"

    print("KERNEL_OK")
</pallas_src>

<mosaic_0001>
module attributes {stable_mosaic.version = 11 : i64} {
  func.func @_tcn_kernel(%arg0: i32, %arg1: memref<2x12x7xf32, #tpu.memory_space<vmem>>, %arg2: memref<3x7x8xf32, #tpu.memory_space<vmem>>, %arg3: memref<1x8xf32, #tpu.memory_space<vmem>>, %arg4: memref<3x8x7xf32, #tpu.memory_space<vmem>>, %arg5: memref<1x7xf32, #tpu.memory_space<vmem>>, %arg6: memref<2x8x7xf32, #tpu.memory_space<vmem>>) attributes {dimension_semantics = [#tpu.dimension_semantics<parallel>], iteration_bounds = array<i64: 1>, scalar_prefetch = 0 : i64, scratch_operands = 0 : i64, tpu.core_type = #tpu.core_type<tc>, window_params = [{transform_indices = @transform_0, window_bounds = array<i64: 2, 12, 7>}, {pipeline_mode = #tpu.pipeline_mode<synchronous>, transform_indices = @transform_1, window_bounds = array<i64: 3, 7, 8>}, {pipeline_mode = #tpu.pipeline_mode<synchronous>, transform_indices = @transform_2, window_bounds = array<i64: 1, 8>}, {pipeline_mode = #tpu.pipeline_mode<synchronous>, transform_indices = @transform_3, window_bounds = array<i64: 3, 8, 7>}, {pipeline_mode = #tpu.pipeline_mode<synchronous>, transform_indices = @transform_4, window_bounds = array<i64: 1, 7>}, {transform_indices = @transform_5, window_bounds = array<i64: 2, 8, 7>}]} {
    %c0 = arith.constant 0 : index
    %c0_0 = arith.constant 0 : index
    %0 = vector.load %arg3[%c0, %c0_0] : memref<1x8xf32, #tpu.memory_space<vmem>>, vector<1x8xf32>
    %c0_1 = arith.constant 0 : index
    %c0_2 = arith.constant 0 : index
    %1 = vector.load %arg5[%c0_1, %c0_2] : memref<1x7xf32, #tpu.memory_space<vmem>>, vector<1x7xf32>
    %2 = tpu.iota {dimensions = array<i32: 0>} : vector<10x1xi32>
    %c-7_i32 = arith.constant -7 : i32
    %3 = vector.broadcast %c-7_i32 : i32 to vector<10x1xi32>
    %4 = arith.cmpi sge, %2, %3 : vector<10x1xi32>
    %c9_i32 = arith.constant 9 : i32
    %5 = vector.broadcast %c9_i32 : i32 to vector<10x1xi32>
    %6 = arith.cmpi slt, %2, %5 : vector<10x1xi32>
    %7 = arith.andi %4, %6 : vector<10x1xi1>
    %c0_3 = arith.constant 0 : index
    %c0_4 = arith.constant 0 : index
    %c0_5 = arith.constant 0 : index
    %8 = vector.load %arg1[%c0_3, %c0_4, %c0_5] : memref<2x12x7xf32, #tpu.memory_space<vmem>>, vector<1x12x7xf32>
    %9 = vector.shape_cast %8 : vector<1x12x7xf32> to vector<12x7xf32>
    %cst = arith.constant 0.000000e+00 : f32
    %10 = vector.broadcast %cst : f32 to vector<10x8xf32>
    %11 = vector.extract_strided_slice %9 {offsets = [0, 0], sizes = [10, 7], strides = [1, 1]} : vector<12x7xf32> to vector<10x7xf32>
    %c0_6 = arith.constant 0 : index
    %c0_7 = arith.constant 0 : index
    %c0_8 = arith.constant 0 : index
    %12 = vector.load %arg2[%c0_6, %c0_7, %c0_8] : memref<3x7x8xf32, #tpu.memory_space<vmem>>, vector<1x7x8xf32>
    %13 = vector.shape_cast %12 : vector<1x7x8xf32> to vector<7x8xf32>
    %cst_9 = arith.constant dense<0.000000e+00> : vector<10x8xf32>
    %14 = tpu.matmul %11, %13, %cst_9 {dimension_numbers = #tpu.dot_dimension_numbers<[1], [0], [0], [1], [0, 0, 1, 1], [], []>} : vector<10x7xf32>, vector<7x8xf32>, vector<10x8xf32> -> vector<10x8xf32>
    %15 = arith.addf %10, %14 : vector<10x8xf32>
    %16 = vector.extract_strided_slice %9 {offsets = [1, 0], sizes = [10, 7], strides = [1, 1]} : vector<12x7xf32> to vector<10x7xf32>
    %c1 = arith.constant 1 : index
    %c0_10 = arith.constant 0 : index
    %c0_11 = arith.constant 0 : index
    %17 = vector.load %arg2[%c1, %c0_10, %c0_11] : memref<3x7x8xf32, #tpu.memory_space<vmem>>, vector<1x7x8xf32>
    %18 = vector.shape_cast %17 : vector<1x7x8xf32> to vector<7x8xf32>
    %cst_12 = arith.constant dense<0.000000e+00> : vector<10x8xf32>
    %19 = tpu.matmul %16, %18, %cst_12 {dimension_numbers = #tpu.dot_dimension_numbers<[1], [0], [0], [1], [0, 0, 1, 1], [], []>} : vector<10x7xf32>, vector<7x8xf32>, vector<10x8xf32> -> vector<10x8xf32>
    %20 = arith.addf %15, %19 : vector<10x8xf32>
    %21 = vector.extract_strided_slice %9 {offsets = [2, 0], sizes = [10, 7], strides = [1, 1]} : vector<12x7xf32> to vector<10x7xf32>
    %c2 = arith.constant 2 : index
    %c0_13 = arith.constant 0 : index
    %c0_14 = arith.constant 0 : index
    %22 = vector.load %arg2[%c2, %c0_13, %c0_14] : memref<3x7x8xf32, #tpu.memory_space<vmem>>, vector<1x7x8xf32>
    %23 = vector.shape_cast %22 : vector<1x7x8xf32> to vector<7x8xf32>
    %cst_15 = arith.constant dense<0.000000e+00> : vector<10x8xf32>
    %24 = tpu.matmul %21, %23, %cst_15 {dimension_numbers = #tpu.dot_dimension_numbers<[1], [0], [0], [1], [0, 0, 1, 1], [], []>} : vector<10x7xf32>, vector<7x8xf32>, vector<10x8xf32> -> vector<10x8xf32>
    %25 = arith.addf %20, %24 : vector<10x8xf32>
    %26 = vector.broadcast %0 : vector<1x8xf32> to vector<10x8xf32>
    %27 = arith.addf %25, %26 : vector<10x8xf32>
    %cst_16 = arith.constant 0.000000e+00 : f32
    %28 = vector.broadcast %cst_16 : f32 to vector<10x8xf32>
    %29 = arith.maximumf %27, %28 : vector<10x8xf32>
    %cst_17 = arith.constant 0.000000e+00 : f32
    %30 = vector.shape_cast %7 : vector<10x1xi1> to vector<10x1xi1>
    %31 = vector.broadcast %30 : vector<10x1xi1> to vector<10x8xi1>
    %32 = vector.broadcast %cst_17 : f32 to vector<10x8xf32>
    %33 = arith.select %31, %29, %32 : vector<10x8xi1>, vector<10x8xf32>
    %cst_18 = arith.constant 0.000000e+00 : f32
    %34 = vector.broadcast %cst_18 : f32 to vector<8x7xf32>
    %35 = vector.extract_strided_slice %33 {offsets = [0, 0], sizes = [8, 8], strides = [1, 1]} : vector<10x8xf32> to vector<8x8xf32>
    %c0_19 = arith.constant 0 : index
    %c0_20 = arith.constant 0 : index
    %c0_21 = arith.constant 0 : index
    %36 = vector.load %arg4[%c0_19, %c0_20, %c0_21] : memref<3x8x7xf32, #tpu.memory_space<vmem>>, vector<1x8x7xf32>
    %37 = vector.shape_cast %36 : vector<1x8x7xf32> to vector<8x7xf32>
    %cst_22 = arith.constant dense<0.000000e+00> : vector<8x7xf32>
    %38 = tpu.matmul %35, %37, %cst_22 {dimension_numbers = #tpu.dot_dimension_numbers<[1], [0], [0], [1], [0, 0, 1, 1], [], []>} : vector<8x8xf32>, vector<8x7xf32>, vector<8x7xf32> -> vector<8x7xf32>
    %39 = arith.addf %34, %38 : vector<8x7xf32>
    %40 = vector.extract_strided_slice %33 {offsets = [1, 0], sizes = [8, 8], strides = [1, 1]} : vector<10x8xf32> to vector<8x8xf32>
    %c1_23 = arith.constant 1 : index
    %c0_24 = arith.constant 0 : index
    %c0_25 = arith.constant 0 : index
    %41 = vector.load %arg4[%c1_23, %c0_24, %c0_25] : memref<3x8x7xf32, #tpu.memory_space<vmem>>, vector<1x8x7xf32>
    %42 = vector.shape_cast %41 : vector<1x8x7xf32> to vector<8x7xf32>
    %cst_26 = arith.constant dense<0.000000e+00> : vector<8x7xf32>
    %43 = tpu.matmul %40, %42, %cst_26 {dimension_numbers = #tpu.dot_dimension_numbers<[1], [0], [0], [1], [0, 0, 1, 1], [], []>} : vector<8x8xf32>, vector<8x7xf32>, vector<8x7xf32> -> vector<8x7xf32>
    %44 = arith.addf %39, %43 : vector<8x7xf32>
    %45 = vector.extract_strided_slice %33 {offsets = [2, 0], sizes = [8, 8], strides = [1, 1]} : vector<10x8xf32> to vector<8x8xf32>
    %c2_27 = arith.constant 2 : index
    %c0_28 = arith.constant 0 : index
    %c0_29 = arith.constant 0 : index
    %46 = vector.load %arg4[%c2_27, %c0_28, %c0_29] : memref<3x8x7xf32, #tpu.memory_space<vmem>>, vector<1x8x7xf32>
    %47 = vector.shape_cast %46 : vector<1x8x7xf32> to vector<8x7xf32>
    %cst_30 = arith.constant dense<0.000000e+00> : vector<8x7xf32>
    %48 = tpu.matmul %45, %47, %cst_30 {dimension_numbers = #tpu.dot_dimension_numbers<[1], [0], [0], [1], [0, 0, 1, 1], [], []>} : vector<8x8xf32>, vector<8x7xf32>, vector<8x7xf32> -> vector<8x7xf32>
    %49 = arith.addf %44, %48 : vector<8x7xf32>
    %50 = vector.broadcast %1 : vector<1x7xf32> to vector<8x7xf32>
    %51 = arith.addf %49, %50 : vector<8x7xf32>
    %52 = vector.extract_strided_slice %9 {offsets = [2, 0], sizes = [8, 7], strides = [1, 1]} : vector<12x7xf32> to vector<8x7xf32>
    %53 = arith.addf %52, %51 : vector<8x7xf32>
    %cst_31 = arith.constant 0.000000e+00 : f32
    %54 = vector.broadcast %cst_31 : f32 to vector<8x7xf32>
    %55 = arith.maximumf %53, %54 : vector<8x7xf32>
    %c0_32 = arith.constant 0 : index
    %c0_33 = arith.constant 0 : index
    %c0_34 = arith.constant 0 : index
    %56 = vector.load %arg6[%c0_32, %c0_33, %c0_34] : memref<2x8x7xf32, #tpu.memory_space<vmem>>, vector<1x8x7xf32>
    %57 = vector.shape_cast %56 : vector<1x8x7xf32> to vector<8x7xf32>
    %58 = vector.shape_cast %55 : vector<8x7xf32> to vector<1x8x7xf32>
    tpu.vector_store %arg6[%c0_32, %c0_33, %c0_34], %58 {strides = array<i32>} : memref<2x8x7xf32, #tpu.memory_space<vmem>>, vector<1x8x7xf32>,
    %c1_35 = arith.constant 1 : index
    %c0_36 = arith.constant 0 : index
    %c0_37 = arith.constant 0 : index
    %59 = vector.load %arg1[%c1_35, %c0_36, %c0_37] : memref<2x12x7xf32, #tpu.memory_space<vmem>>, vector<1x12x7xf32>
    %60 = vector.shape_cast %59 : vector<1x12x7xf32> to vector<12x7xf32>
    %cst_38 = arith.constant 0.000000e+00 : f32
    %61 = vector.broadcast %cst_38 : f32 to vector<10x8xf32>
    %62 = vector.extract_strided_slice %60 {offsets = [0, 0], sizes = [10, 7], strides = [1, 1]} : vector<12x7xf32> to vector<10x7xf32>
    %c0_39 = arith.constant 0 : index
    %c0_40 = arith.constant 0 : index
    %c0_41 = arith.constant 0 : index
    %63 = vector.load %arg2[%c0_39, %c0_40, %c0_41] : memref<3x7x8xf32, #tpu.memory_space<vmem>>, vector<1x7x8xf32>
    %64 = vector.shape_cast %63 : vector<1x7x8xf32> to vector<7x8xf32>
    %cst_42 = arith.constant dense<0.000000e+00> : vector<10x8xf32>
    %65 = tpu.matmul %62, %64, %cst_42 {dimension_numbers = #tpu.dot_dimension_numbers<[1], [0], [0], [1], [0, 0, 1, 1], [], []>} : vector<10x7xf32>, vector<7x8xf32>, vector<10x8xf32> -> vector<10x8xf32>
    %66 = arith.addf %61, %65 : vector<10x8xf32>
    %67 = vector.extract_strided_slice %60 {offsets = [1, 0], sizes = [10, 7], strides = [1, 1]} : vector<12x7xf32> to vector<10x7xf32>
    %c1_43 = arith.constant 1 : index
    %c0_44 = arith.constant 0 : index
    %c0_45 = arith.constant 0 : index
    %68 = vector.load %arg2[%c1_43, %c0_44, %c0_45] : memref<3x7x8xf32, #tpu.memory_space<vmem>>, vector<1x7x8xf32>
    %69 = vector.shape_cast %68 : vector<1x7x8xf32> to vector<7x8xf32>
    %cst_46 = arith.constant dense<0.000000e+00> : vector<10x8xf32>
    %70 = tpu.matmul %67, %69, %cst_46 {dimension_numbers = #tpu.dot_dimension_numbers<[1], [0], [0], [1], [0, 0, 1, 1], [], []>} : vector<10x7xf32>, vector<7x8xf32>, vector<10x8xf32> -> vector<10x8xf32>
    %71 = arith.addf %66, %70 : vector<10x8xf32>
    %72 = vector.extract_strided_slice %60 {offsets = [2, 0], sizes = [10, 7], strides = [1, 1]} : vector<12x7xf32> to vector<10x7xf32>
    %c2_47 = arith.constant 2 : index
    %c0_48 = arith.constant 0 : index
    %c0_49 = arith.constant 0 : index
    %73 = vector.load %arg2[%c2_47, %c0_48, %c0_49] : memref<3x7x8xf32, #tpu.memory_space<vmem>>, vector<1x7x8xf32>
    %74 = vector.shape_cast %73 : vector<1x7x8xf32> to vector<7x8xf32>
    %cst_50 = arith.constant dense<0.000000e+00> : vector<10x8xf32>
    %75 = tpu.matmul %72, %74, %cst_50 {dimension_numbers = #tpu.dot_dimension_numbers<[1], [0], [0], [1], [0, 0, 1, 1], [], []>} : vector<10x7xf32>, vector<7x8xf32>, vector<10x8xf32> -> vector<10x8xf32>
    %76 = arith.addf %71, %75 : vector<10x8xf32>
    %77 = vector.broadcast %0 : vector<1x8xf32> to vector<10x8xf32>
    %78 = arith.addf %76, %77 : vector<10x8xf32>
    %cst_51 = arith.constant 0.000000e+00 : f32
    %79 = vector.broadcast %cst_51 : f32 to vector<10x8xf32>
    %80 = arith.maximumf %78, %79 : vector<10x8xf32>
    %cst_52 = arith.constant 0.000000e+00 : f32
    %81 = vector.shape_cast %7 : vector<10x1xi1> to vector<10x1xi1>
    %82 = vector.broadcast %81 : vector<10x1xi1> to vector<10x8xi1>
    %83 = vector.broadcast %cst_52 : f32 to vector<10x8xf32>
    %84 = arith.select %82, %80, %83 : vector<10x8xi1>, vector<10x8xf32>
    %cst_53 = arith.constant 0.000000e+00 : f32
    %85 = vector.broadcast %cst_53 : f32 to vector<8x7xf32>
    %86 = vector.extract_strided_slice %84 {offsets = [0, 0], sizes = [8, 8], strides = [1, 1]} : vector<10x8xf32> to vector<8x8xf32>
    %c0_54 = arith.constant 0 : index
    %c0_55 = arith.constant 0 : index
    %c0_56 = arith.constant 0 : index
    %87 = vector.load %arg4[%c0_54, %c0_55, %c0_56] : memref<3x8x7xf32, #tpu.memory_space<vmem>>, vector<1x8x7xf32>
    %88 = vector.shape_cast %87 : vector<1x8x7xf32> to vector<8x7xf32>
    %cst_57 = arith.constant dense<0.000000e+00> : vector<8x7xf32>
    %89 = tpu.matmul %86, %88, %cst_57 {dimension_numbers = #tpu.dot_dimension_numbers<[1], [0], [0], [1], [0, 0, 1, 1], [], []>} : vector<8x8xf32>, vector<8x7xf32>, vector<8x7xf32> -> vector<8x7xf32>
    %90 = arith.addf %85, %89 : vector<8x7xf32>
    %91 = vector.extract_strided_slice %84 {offsets = [1, 0], sizes = [8, 8], strides = [1, 1]} : vector<10x8xf32> to vector<8x8xf32>
    %c1_58 = arith.constant 1 : index
    %c0_59 = arith.constant 0 : index
    %c0_60 = arith.constant 0 : index
    %92 = vector.load %arg4[%c1_58, %c0_59, %c0_60] : memref<3x8x7xf32, #tpu.memory_space<vmem>>, vector<1x8x7xf32>
    %93 = vector.shape_cast %92 : vector<1x8x7xf32> to vector<8x7xf32>
    %cst_61 = arith.constant dense<0.000000e+00> : vector<8x7xf32>
    %94 = tpu.matmul %91, %93, %cst_61 {dimension_numbers = #tpu.dot_dimension_numbers<[1], [0], [0], [1], [0, 0, 1, 1], [], []>} : vector<8x8xf32>, vector<8x7xf32>, vector<8x7xf32> -> vector<8x7xf32>
    %95 = arith.addf %90, %94 : vector<8x7xf32>
    %96 = vector.extract_strided_slice %84 {offsets = [2, 0], sizes = [8, 8], strides = [1, 1]} : vector<10x8xf32> to vector<8x8xf32>
    %c2_62 = arith.constant 2 : index
    %c0_63 = arith.constant 0 : index
    %c0_64 = arith.constant 0 : index
    %97 = vector.load %arg4[%c2_62, %c0_63, %c0_64] : memref<3x8x7xf32, #tpu.memory_space<vmem>>, vector<1x8x7xf32>
    %98 = vector.shape_cast %97 : vector<1x8x7xf32> to vector<8x7xf32>
    %cst_65 = arith.constant dense<0.000000e+00> : vector<8x7xf32>
    %99 = tpu.matmul %96, %98, %cst_65 {dimension_numbers = #tpu.dot_dimension_numbers<[1], [0], [0], [1], [0, 0, 1, 1], [], []>} : vector<8x8xf32>, vector<8x7xf32>, vector<8x7xf32> -> vector<8x7xf32>
    %100 = arith.addf %95, %99 : vector<8x7xf32>
    %101 = vector.broadcast %1 : vector<1x7xf32> to vector<8x7xf32>
    %102 = arith.addf %100, %101 : vector<8x7xf32>
    %103 = vector.extract_strided_slice %60 {offsets = [2, 0], sizes = [8, 7], strides = [1, 1]} : vector<12x7xf32> to vector<8x7xf32>
    %104 = arith.addf %103, %102 : vector<8x7xf32>
    %cst_66 = arith.constant 0.000000e+00 : f32
    %105 = vector.broadcast %cst_66 : f32 to vector<8x7xf32>
    %106 = arith.maximumf %104, %105 : vector<8x7xf32>
    %c1_67 = arith.constant 1 : index
    %c0_68 = arith.constant 0 : index
    %c0_69 = arith.constant 0 : index
    %107 = vector.load %arg6[%c1_67, %c0_68, %c0_69] : memref<2x8x7xf32, #tpu.memory_space<vmem>>, vector<1x8x7xf32>
    %108 = vector.shape_cast %107 : vector<1x8x7xf32> to vector<8x7xf32>
    %109 = vector.shape_cast %106 : vector<8x7xf32> to vector<1x8x7xf32>
    tpu.vector_store %arg6[%c1_67, %c0_68, %c0_69], %109 {strides = array<i32>} : memref<2x8x7xf32, #tpu.memory_space<vmem>>, vector<1x8x7xf32>,
    return
  }
  func.func @transform_0(%arg0: i32) -> (i32, i32, i32) {
    %c0_i32 = arith.constant 0 : i32
    %c0_i32_0 = arith.constant 0 : i32
    %c0_i32_1 = arith.constant 0 : i32
    return %arg0, %c0_i32, %c0_i32_0 : i32, i32, i32
  }
  func.func @transform_1(%arg0: i32) -> (i32, i32, i32) {
    %c0_i32 = arith.constant 0 : i32
    %c0_i32_0 = arith.constant 0 : i32
    %c0_i32_1 = arith.constant 0 : i32
    %c0_i32_2 = arith.constant 0 : i32
    return %c0_i32, %c0_i32_0, %c0_i32_1 : i32, i32, i32
  }
  func.func @transform_2(%arg0: i32) -> (i32, i32) {
    %c0_i32 = arith.constant 0 : i32
    %c0_i32_0 = arith.constant 0 : i32
    %c0_i32_1 = arith.constant 0 : i32
    return %c0_i32, %c0_i32_0 : i32, i32
  }
  func.func @transform_3(%arg0: i32) -> (i32, i32, i32) {
    %c0_i32 = arith.constant 0 : i32
    %c0_i32_0 = arith.constant 0 : i32
    %c0_i32_1 = arith.constant 0 : i32
    %c0_i32_2 = arith.constant 0 : i32
    return %c0_i32, %c0_i32_0, %c0_i32_1 : i32, i32, i32
  }
  func.func @transform_4(%arg0: i32) -> (i32, i32) {
    %c0_i32 = arith.constant 0 : i32
    %c0_i32_0 = arith.constant 0 : i32
    %c0_i32_1 = arith.constant 0 : i32
    return %c0_i32, %c0_i32_0 : i32, i32
  }
  func.func @transform_5(%arg0: i32) -> (i32, i32, i32) {
    %c0_i32 = arith.constant 0 : i32
    %c0_i32_0 = arith.constant 0 : i32
    %c0_i32_1 = arith.constant 0 : i32
    return %arg0, %c0_i32, %c0_i32_0 : i32, i32, i32
  }
}

</mosaic_0001>

<llo_original>
// kernel: tpu_custom_call.1
$region0: #{tpu_custom_call.1}
  #allocation0 [shape = 'u32[]', space=smem, size = 0x4, offset = 0x4, fixed_abs, tag = 'smem constant byte address 0x4 - core index']
  #allocation1 [shape = 'u32[72,128]{1,0:T(1,128)}', space=vmem, size = 0x9000, scoped, tag = 'internal scratch']
  %s0 = inlined_call_operand.vmem [shape: f32[2,12,7], index: 0, kind: input, shape index: {}]
  %s1 = inlined_call_operand.vmem [shape: f32[3,7,8], index: 1, kind: input, shape index: {}]
  %s2 = inlined_call_operand.hbm [shape: f32[1,8], index: 2, kind: input, shape index: {}]
  %s3 = inlined_call_operand.vmem [shape: f32[3,8,7], index: 3, kind: input, shape index: {}]
  %s4 = inlined_call_operand.vmem [shape: f32[1,7], index: 4, kind: input, shape index: {}]
  %s5 = inlined_call_operand.vmem [shape: f32[2,8,7], index: 5, kind: output, shape index: {}]
  %s6 = sld [smem:[#allocation0]]
  $region34: #{tpu_custom_call.1} parent=0
    _
  %s8 = ssub.s32 1, %s6
  %s9 = scalar_select 0, %s8, %s6
  $region1: #{tpu_custom_call.1} parent=0
    #allocation2 [shape = 'u8[512]{0}', space=vmem, size = 0x400, scoped, tag = 'input window, operand 2, single buffered']
    #allocation3 [shape = 's32[1]{0}', space=sflag, size = 0x4, scoped, tag = 'scoped memory for tpu_custom_call.1']
    %10 = vsyncpa [#allocation3], 0
    // Predicated region
    $region2: #{tpu_custom_call.1} parent=1 // pred_check
      _
    $region3: #{tpu_custom_call.1} parent=1 // pred_check_branch
      %12 = sbr.rel (0) target = $region5
    $region4: #{tpu_custom_call.1} parent=1 // pred_region
      _
    $region5: #{tpu_custom_call.1} parent=1 // pred_fallthru
      _
    // Predicated region
    $region6: #{tpu_custom_call.1} parent=1 // pred_check
      _
    $region7: #{tpu_custom_call.1} parent=1 // pred_check_branch
      %14 = sbr.rel (0) target = $region9
    $region8: #{tpu_custom_call.1} parent=1 // pred_region
      _
    $region9: #{tpu_custom_call.1} parent=1 // pred_fallthru
      _
    // Predicated region
    $region10: #{tpu_custom_call.1} parent=1 // pred_check
      _
    $region11: #{tpu_custom_call.1} parent=1 // pred_check_branch
      %16 = sbr.rel (0) target = $region13
    $region12: #{tpu_custom_call.1} parent=1 // pred_region
      %18 = vsyncadd [#allocation3], 0
      %s20 = sshll.u32 %s2, 4
      %s21 = int_to_ptr.hbm [resolvable:$true] %s20
      %s22 = sshll.u32 [#allocation2], 4
      %s23 = int_to_ptr.vmem [resolvable:$true] %s22
      %25 = dma.hbm_to_vmem [thread:$0]  %s21, 16, %s23, [#allocation3]
    $region13: #{tpu_custom_call.1} parent=1 // pred_fallthru
      _
    // Predicated region
    $region14: #{tpu_custom_call.1} parent=1 // pred_check
      _
    $region15: #{tpu_custom_call.1} parent=1 // pred_check_branch
      %27 = sbr.rel (0) target = $region17
    $region16: #{tpu_custom_call.1} parent=1 // pred_region
      _
    $region17: #{tpu_custom_call.1} parent=1 // pred_fallthru
      _
    // Predicated region
    $region18: #{tpu_custom_call.1} parent=1 // pred_check
      _
    $region19: #{tpu_custom_call.1} parent=1 // pred_check_branch
      %29 = sbr.rel (0) target = $region21
    $region20: #{tpu_custom_call.1} parent=1 // pred_region
      _
    $region21: #{tpu_custom_call.1} parent=1 // pred_fallthru
      _
    // Predicated region
    $region22: #{tpu_custom_call.1} parent=1 // pred_check
      _
    $region23: #{tpu_custom_call.1} parent=1 // pred_check_branch
      %31 = sbr.rel (0) target = $region25
    $region24: #{tpu_custom_call.1} parent=1 // pred_region
      %33 = dma.done [#allocation3], 16
    $region25: #{tpu_custom_call.1} parent=1 // pred_fallthru
      _
    %v34 = vld [vmem:[#allocation2] sm:$0x1]
    %v35 = vld [vmem:[%s4] sm:$0x1]
    %v36 = vlaneseq
    %v37 = vshrl.u32 %v36, 7
    %v38 = vadd.s32 %v37, 8
    %vm39 = vcmp.ge.s32.totalorder %v37, 4294967289
    %vm40 = vcmp.ge.s32.totalorder %v38, 4294967289
    %vm41 = vcmp.lt.s32.totalorder %v37, 9
    %vm42 = vcmp.lt.s32.totalorder %v38, 9
    %vm43 = vmand %vm39, %vm41
    %vm44 = vmand %vm40, %vm42
    %v45 = vld [vmem:[%s0] sm:$0xff]
    %v46 = vld [vmem:[%s0 + $0x8] sm:$0xf]
    %v47 = vld [vmem:[%s1] sm:$0x7f]
    %s48 = scalar_lea.vmem %s1, 8
    %v49 = vld [vmem:[%s48] sm:$0x7f]
    %vm52 = vcmask 1046528
    %v53 = vrot.slane %v45, 1
    %v54 = vrot.slane %v46, 1
    %v55 = vsel %vm52, %v53, %v54
    %vm56 = vcmask 56320
    %v57 = vsel %vm56, %v55, 0
    %v59 = vsel %vm56, %v54, 0
    %v62 = vsel %vm52, %v49, 0
    %64 = vmatpush.msra.mxu0 0.0
    %65 = vmatpush.msra.mxu0 0.0
    %66 = vmatpush.msra.mxu0 0.0
    %67 = vmatpush.msra.mxu0 0.0
    %68 = vmatpush.msra.mxu0 0.0
    %69 = vmatpush.msra.mxu0 0.0
    %70 = vmatpush.msra.mxu0 0.0
    %71 = vmatpush.msra.mxu0 0.0
    %72 = vmatpush.msra.mxu0 0.0
    %73 = vmatpush.msra.mxu0 0.0
    %74 = vmatpush.msra.mxu0 0.0
    %75 = vmatpush.msra.mxu0 0.0
    %76 = vmatpush.msra.mxu0 0.0
    %77 = vmatpush.msra.mxu0 0.0
    %78 = vmatpush.msra.mxu0 0.0
    %79 = vmatpush.msra.mxu0 %v62
    %80 = vmatmul.f32.gmra.mxu0 %v57
    %v81 = vpop.f32.mrf.mxu0
    %v82 = vadd.f32 0.0, %v81
    %83 = vmatmul.f32.gmra.mxu0 %v59
    %v84 = vpop.f32.mrf.mxu0
    %v85 = vadd.f32 0.0, %v84
    %86 = vdwg.mxu0
    %v87 = vsel %vm56, %v45, 0
    %v89 = vsel %vm56, %v46, 0
    %v92 = vsel %vm52, %v47, 0
    %94 = vmatpush.msra.mxu0 0.0
    %95 = vmatpush.msra.mxu0 0.0
    %96 = vmatpush.msra.mxu0 0.0
    %97 = vmatpush.msra.mxu0 0.0
    %98 = vmatpush.msra.mxu0 0.0
    %99 = vmatpush.msra.mxu0 0.0
    %100 = vmatpush.msra.mxu0 0.0
    %101 = vmatpush.msra.mxu0 0.0
    %102 = vmatpush.msra.mxu0 0.0
    %103 = vmatpush.msra.mxu0 0.0
    %104 = vmatpush.msra.mxu0 0.0
    %105 = vmatpush.msra.mxu0 0.0
    %106 = vmatpush.msra.mxu0 0.0
    %107 = vmatpush.msra.mxu0 0.0
    %108 = vmatpush.msra.mxu0 0.0
    %109 = vmatpush.msra.mxu0 %v92
    %110 = vmatmul.f32.gmra.mxu0 %v87
    %v111 = vpop.f32.mrf.mxu0
    %v112 = vadd.f32 %v82, %v111
    %113 = vmatmul.f32.gmra.mxu0 %v89
    %v114 = vpop.f32.mrf.mxu0
    %v115 = vadd.f32 %v85, %v114
    %116 = vdwg.mxu0
    %s117 = scalar_lea.vmem %s1, 16
    %v118 = vld [vmem:[%s117] sm:$0x7f]
    %vm119 = vcmask 1045504
    %v120 = vrot.slane %v45, 2
    %v121 = vrot.slane %v46, 2
    %v122 = vsel %vm119, %v120, %v121
    %v123 = vsel %vm56, %v122, 0
    %v125 = vsel %vm56, %v121, 0
    %v128 = vsel %vm52, %v118, 0
    %130 = vmatpush.msra.mxu0 0.0
    %131 = vmatpush.msra.mxu0 0.0
    %132 = vmatpush.msra.mxu0 0.0
    %133 = vmatpush.msra.mxu0 0.0
    %134 = vmatpush.msra.mxu0 0.0
    %135 = vmatpush.msra.mxu0 0.0
    %136 = vmatpush.msra.mxu0 0.0
    %137 = vmatpush.msra.mxu0 0.0
    %138 = vmatpush.msra.mxu0 0.0
    %139 = vmatpush.msra.mxu0 0.0
    %140 = vmatpush.msra.mxu0 0.0
    %141 = vmatpush.msra.mxu0 0.0
    %142 = vmatpush.msra.mxu0 0.0
    %143 = vmatpush.msra.mxu0 0.0
    %144 = vmatpush.msra.mxu0 0.0
    %145 = vmatpush.msra.mxu0 %v128
    %146 = vmatmul.f32.gmra.mxu0 %v123
    %v147 = vpop.f32.mrf.mxu0
    %v148 = vadd.f32 0.0, %v147
    %149 = vmatmul.f32.gmra.mxu0 %v125
    %v150 = vpop.f32.mrf.mxu0
    %v151 = vadd.f32 0.0, %v150
    %152 = vdwg.mxu0
    %v153 = vadd.f32 %v112, %v148
    %v154 = vadd.f32 %v115, %v151
    %v156 = vperm.slane %v34, 0
    %v158 = vadd.f32 %v153, %v156
    %v159 = vadd.f32 %v154, %v156
    %v160 = vmax.f32 %v158, 0.0
    %v161 = vmax.f32 %v159, 0.0
    %v162 = vsel %vm43, 1, 0
    %v163 = vsel %vm44, 1, 0
    %vm164 = vcmp.eq.s32.totalorder %v162, 1
    %vm165 = vcmp.eq.s32.totalorder %v163, 1
    %v166 = vsel %vm164, %v160, 0.0
    %v167 = vsel %vm165, %v161, 0.0
    %v168 = vld [vmem:[%s3] sm:$0xff]
    %s169 = scalar_lea.vmem %s3, 8
    %v170 = vld [vmem:[%s169] sm:$0xff]
    %v173 = vrot.slane %v166, 1
    %v174 = vrot.slane %v167, 1
    %v175 = vsel %vm52, %v173, %v174
    %vm176 = vcmask 64512
    %v177 = vsel %vm176, %v175, 0
    %179 = vmatpush.msra.mxu0 0.0
    %180 = vmatpush.msra.mxu0 0.0
    %181 = vmatpush.msra.mxu0 0.0
    %182 = vmatpush.msra.mxu0 0.0
    %183 = vmatpush.msra.mxu0 0.0
    %184 = vmatpush.msra.mxu0 0.0
    %185 = vmatpush.msra.mxu0 0.0
    %186 = vmatpush.msra.mxu0 0.0
    %187 = vmatpush.msra.mxu0 0.0
    %188 = vmatpush.msra.mxu0 0.0
    %189 = vmatpush.msra.mxu0 0.0
    %190 = vmatpush.msra.mxu0 0.0
    %191 = vmatpush.msra.mxu0 0.0
    %192 = vmatpush.msra.mxu0 0.0
    %193 = vmatpush.msra.mxu0 0.0
    %194 = vmatpush.msra.mxu0 %v170
    %195 = vmatmul.f32.gmra.mxu0 %v177
    %v196 = vpop.f32.mrf.mxu0
    %v197 = vadd.f32 0.0, %v196
    %198 = vdwg.mxu0
    %v199 = vsel %vm176, %v166, 0
    %201 = vmatpush.msra.mxu0 0.0
    %202 = vmatpush.msra.mxu0 0.0
    %203 = vmatpush.msra.mxu0 0.0
    %204 = vmatpush.msra.mxu0 0.0
    %205 = vmatpush.msra.mxu0 0.0
    %206 = vmatpush.msra.mxu0 0.0
    %207 = vmatpush.msra.mxu0 0.0
    %208 = vmatpush.msra.mxu0 0.0
    %209 = vmatpush.msra.mxu0 0.0
    %210 = vmatpush.msra.mxu0 0.0
    %211 = vmatpush.msra.mxu0 0.0
    %212 = vmatpush.msra.mxu0 0.0
    %213 = vmatpush.msra.mxu0 0.0
    %214 = vmatpush.msra.mxu0 0.0
    %215 = vmatpush.msra.mxu0 0.0
    %216 = vmatpush.msra.mxu0 %v168
    %217 = vmatmul.f32.gmra.mxu0 %v199
    %v218 = vpop.f32.mrf.mxu0
    %v219 = vadd.f32 %v197, %v218
    %220 = vdwg.mxu0
    %s221 = scalar_lea.vmem %s3, 16
    %v222 = vld [vmem:[%s221] sm:$0xff]
    %v223 = vrot.slane %v166, 2
    %v224 = vrot.slane %v167, 2
    %v225 = vsel %vm119, %v223, %v224
    %v226 = vsel %vm176, %v225, 0
    %228 = vmatpush.msra.mxu0 0.0
    %229 = vmatpush.msra.mxu0 0.0
    %230 = vmatpush.msra.mxu0 0.0
    %231 = vmatpush.msra.mxu0 0.0
    %232 = vmatpush.msra.mxu0 0.0
    %233 = vmatpush.msra.mxu0 0.0
    %234 = vmatpush.msra.mxu0 0.0
    %235 = vmatpush.msra.mxu0 0.0
    %236 = vmatpush.msra.mxu0 0.0
    %237 = vmatpush.msra.mxu0 0.0
    %238 = vmatpush.msra.mxu0 0.0
    %239 = vmatpush.msra.mxu0 0.0
    %240 = vmatpush.msra.mxu0 0.0
    %241 = vmatpush.msra.mxu0 0.0
    %242 = vmatpush.msra.mxu0 0.0
    %243 = vmatpush.msra.mxu0 %v222
    %244 = vmatmul.f32.gmra.mxu0 %v226
    %v245 = vpop.f32.mrf.mxu0
    %v246 = vadd.f32 0.0, %v245
    %247 = vdwg.mxu0
    %v248 = vadd.f32 %v219, %v246
    %v250 = vperm.slane %v35, 0
    %v252 = vadd.f32 %v248, %v250
    %v254 = vrot.slane %v252, 6
    %v256 = vadd.f32 %v45, %v254
    %v257 = vadd.f32 %v46, %v254
    %v258 = vmax.f32 %v256, 0.0
    %v259 = vmax.f32 %v257, 0.0
    %vm260 = vcmask 56322
    %261 = vst.msk [vmem:[%s5 - $0x2] sm:$0xfc] %vm260, %v258
    %vm262 = vcmask 50176
    %263 = vst.msk [vmem:[%s5 + $0x6] sm:$0x3] %vm262, %v259
    %s264 = scalar_lea.vmem %s0, 16
    %v265 = vld [vmem:[%s264] sm:$0xff]
    %v266 = vld [vmem:[%s264 + $0x8] sm:$0xf]
    %v267 = vld [vmem:[%s1] sm:$0x7f]
    %v268 = vld [vmem:[%s48] sm:$0x7f]
    %v271 = vrot.slane %v265, 1
    %v272 = vrot.slane %v266, 1
    %v273 = vsel %vm52, %v271, %v272
    %v274 = vsel %vm56, %v273, 0
    %v276 = vsel %vm56, %v272, 0
    %v279 = vsel %vm52, %v268, 0
    %281 = vmatpush.msra.mxu0 0.0
    %282 = vmatpush.msra.mxu0 0.0
    %283 = vmatpush.msra.mxu0 0.0
    %284 = vmatpush.msra.mxu0 0.0
    %285 = vmatpush.msra.mxu0 0.0
    %286 = vmatpush.msra.mxu0 0.0
    %287 = vmatpush.msra.mxu0 0.0
    %288 = vmatpush.msra.mxu0 0.0
    %289 = vmatpush.msra.mxu0 0.0
    %290 = vmatpush.msra.mxu0 0.0
    %291 = vmatpush.msra.mxu0 0.0
    %292 = vmatpush.msra.mxu0 0.0
    %293 = vmatpush.msra.mxu0 0.0
    %294 = vmatpush.msra.mxu0 0.0
    %295 = vmatpush.msra.mxu0 0.0
    %296 = vmatpush.msra.mxu0 %v279
    %297 = vmatmul.f32.gmra.mxu0 %v274
    %v298 = vpop.f32.mrf.mxu0
    %v299 = vadd.f32 0.0, %v298
    %300 = vmatmul.f32.gmra.mxu0 %v276
    %v301 = vpop.f32.mrf.mxu0
    %v302 = vadd.f32 0.0, %v301
    %303 = vdwg.mxu0
    %v304 = vsel %vm56, %v265, 0
    %v306 = vsel %vm56, %v266, 0
    %v309 = vsel %vm52, %v267, 0
    %311 = vmatpush.msra.mxu0 0.0
    %312 = vmatpush.msra.mxu0 0.0
    %313 = vmatpush.msra.mxu0 0.0
    %314 = vmatpush.msra.mxu0 0.0
    %315 = vmatpush.msra.mxu0 0.0
    %316 = vmatpush.msra.mxu0 0.0
    %317 = vmatpush.msra.mxu0 0.0
    %318 = vmatpush.msra.mxu0 0.0
    %319 = vmatpush.msra.mxu0 0.0
    %320 = vmatpush.msra.mxu0 0.0
    %321 = vmatpush.msra.mxu0 0.0
    %322 = vmatpush.msra.mxu0 0.0
    %323 = vmatpush.msra.mxu0 0.0
    %324 = vmatpush.msra.mxu0 0.0
    %325 = vmatpush.msra.mxu0 0.0
    %326 = vmatpush.msra.mxu0 %v309
    %327 = vmatmul.f32.gmra.mxu0 %v304
    %v328 = vpop.f32.mrf.mxu0
    %v329 = vadd.f32 %v299, %v328
    %330 = vmatmul.f32.gmra.mxu0 %v306
    %v331 = vpop.f32.mrf.mxu0
    %v332 = vadd.f32 %v302, %v331
    %333 = vdwg.mxu0
    %v334 = vld [vmem:[%s117] sm:$0x7f]
    %v335 = vrot.slane %v265, 2
    %v336 = vrot.slane %v266, 2
    %v337 = vsel %vm119, %v335, %v336
    %v338 = vsel %vm56, %v337, 0
    %v340 = vsel %vm56, %v336, 0
    %v343 = vsel %vm52, %v334, 0
    %345 = vmatpush.msra.mxu0 0.0
    %346 = vmatpush.msra.mxu0 0.0
    %347 = vmatpush.msra.mxu0 0.0
    %348 = vmatpush.msra.mxu0 0.0
    %349 = vmatpush.msra.mxu0 0.0
    %350 = vmatpush.msra.mxu0 0.0
    %351 = vmatpush.msra.mxu0 0.0
    %352 = vmatpush.msra.mxu0 0.0
    %353 = vmatpush.msra.mxu0 0.0
    %354 = vmatpush.msra.mxu0 0.0
    %355 = vmatpush.msra.mxu0 0.0
    %356 = vmatpush.msra.mxu0 0.0
    %357 = vmatpush.msra.mxu0 0.0
    %358 = vmatpush.msra.mxu0 0.0
    %359 = vmatpush.msra.mxu0 0.0
    %360 = vmatpush.msra.mxu0 %v343
    %361 = vmatmul.f32.gmra.mxu0 %v338
    %v362 = vpop.f32.mrf.mxu0
    %v363 = vadd.f32 0.0, %v362
    %364 = vmatmul.f32.gmra.mxu0 %v340
    %v365 = vpop.f32.mrf.mxu0
    %v366 = vadd.f32 0.0, %v365
    %367 = vdwg.mxu0
    %v368 = vadd.f32 %v329, %v363
    %v369 = vadd.f32 %v332, %v366
    %v370 = vadd.f32 %v368, %v156
    %v371 = vadd.f32 %v369, %v156
    %v372 = vmax.f32 %v370, 0.0
    %v373 = vmax.f32 %v371, 0.0
    %v374 = vsel %vm164, %v372, 0.0
    %v375 = vsel %vm165, %v373, 0.0
    %v376 = vld [vmem:[%s3] sm:$0xff]
    %v377 = vld [vmem:[%s169] sm:$0xff]
    %v380 = vrot.slane %v374, 1
    %v381 = vrot.slane %v375, 1
    %v382 = vsel %vm52, %v380, %v381
    %v383 = vsel %vm176, %v382, 0
    %385 = vmatpush.msra.mxu0 0.0
    %386 = vmatpush.msra.mxu0 0.0
    %387 = vmatpush.msra.mxu0 0.0
    %388 = vmatpush.msra.mxu0 0.0
    %389 = vmatpush.msra.mxu0 0.0
    %390 = vmatpush.msra.mxu0 0.0
    %391 = vmatpush.msra.mxu0 0.0
    %392 = vmatpush.msra.mxu0 0.0
    %393 = vmatpush.msra.mxu0 0.0
    %394 = vmatpush.msra.mxu0 0.0
    %395 = vmatpush.msra.mxu0 0.0
    %396 = vmatpush.msra.mxu0 0.0
    %397 = vmatpush.msra.mxu0 0.0
    %398 = vmatpush.msra.mxu0 0.0
    %399 = vmatpush.msra.mxu0 0.0
    %400 = vmatpush.msra.mxu0 %v377
    %401 = vmatmul.f32.gmra.mxu0 %v383
    %v402 = vpop.f32.mrf.mxu0
    %v403 = vadd.f32 0.0, %v402
    %404 = vdwg.mxu0
    %v405 = vsel %vm176, %v374, 0
    %407 = vmatpush.msra.mxu0 0.0
    %408 = vmatpush.msra.mxu0 0.0
    %409 = vmatpush.msra.mxu0 0.0
    %410 = vmatpush.msra.mxu0 0.0
    %411 = vmatpush.msra.mxu0 0.0
    %412 = vmatpush.msra.mxu0 0.0
    %413 = vmatpush.msra.mxu0 0.0
    %414 = vmatpush.msra.mxu0 0.0
    %415 = vmatpush.msra.mxu0 0.0
    %416 = vmatpush.msra.mxu0 0.0
    %417 = vmatpush.msra.mxu0 0.0
    %418 = vmatpush.msra.mxu0 0.0
    %419 = vmatpush.msra.mxu0 0.0
    %420 = vmatpush.msra.mxu0 0.0
    %421 = vmatpush.msra.mxu0 0.0
    %422 = vmatpush.msra.mxu0 %v376
    %423 = vmatmul.f32.gmra.mxu0 %v405
    %v424 = vpop.f32.mrf.mxu0
    %v425 = vadd.f32 %v403, %v424
    %426 = vdwg.mxu0
    %v427 = vld [vmem:[%s221] sm:$0xff]
    %v428 = vrot.slane %v374, 2
    %v429 = vrot.slane %v375, 2
    %v430 = vsel %vm119, %v428, %v429
    %v431 = vsel %vm176, %v430, 0
    %433 = vmatpush.msra.mxu0 0.0
    %434 = vmatpush.msra.mxu0 0.0
    %435 = vmatpush.msra.mxu0 0.0
    %436 = vmatpush.msra.mxu0 0.0
    %437 = vmatpush.msra.mxu0 0.0
    %438 = vmatpush.msra.mxu0 0.0
    %439 = vmatpush.msra.mxu0 0.0
    %440 = vmatpush.msra.mxu0 0.0
    %441 = vmatpush.msra.mxu0 0.0
    %442 = vmatpush.msra.mxu0 0.0
    %443 = vmatpush.msra.mxu0 0.0
    %444 = vmatpush.msra.mxu0 0.0
    %445 = vmatpush.msra.mxu0 0.0
    %446 = vmatpush.msra.mxu0 0.0
    %447 = vmatpush.msra.mxu0 0.0
    %448 = vmatpush.msra.mxu0 %v427
    %449 = vmatmul.f32.gmra.mxu0 %v431
    %v450 = vpop.f32.mrf.mxu0
    %v451 = vadd.f32 0.0, %v450
    %452 = vdwg.mxu0
    %v453 = vadd.f32 %v425, %v451
    %v454 = vadd.f32 %v453, %v250
    %v456 = vrot.slane %v454, 6
    %v458 = vadd.f32 %v265, %v456
    %v459 = vadd.f32 %v266, %v456
    %v460 = vmax.f32 %v458, 0.0
    %v461 = vmax.f32 %v459, 0.0
    %s462 = scalar_lea.vmem %s5, 8
    %463 = vst.msk [vmem:[%s462 - $0x2] sm:$0xfc] %vm260, %v460
    %464 = vst.msk [vmem:[%s462 + $0x6] sm:$0x3] %vm262, %v461
    // Predicated region
    $region26: #{tpu_custom_call.1} parent=1 // pred_check
      _
    $region27: #{tpu_custom_call.1} parent=1 // pred_check_branch
      %466 = sbr.rel (0) target = $region29
    $region28: #{tpu_custom_call.1} parent=1 // pred_region
      _
    $region29: #{tpu_custom_call.1} parent=1 // pred_fallthru
      _
    // Predicated region
    $region30: #{tpu_custom_call.1} parent=1 // pred_check
      _
    $region31: #{tpu_custom_call.1} parent=1 // pred_check_branch
      %468 = sbr.rel (0) target = $region33
    $region32: #{tpu_custom_call.1} parent=1 // pred_region
      _
    $region33: #{tpu_custom_call.1} parent=1 // pred_fallthru
      _
    %469 = vsyncpa [#allocation3], 1

</llo_original>
